<compile_context>
chip_gen: v7x
topology: tpu7x:2x2x1
jax: 0.10.0
libtpu: 0.0.40
codegen_flags: <defaults>
</compile_context>

<pallas_src>
import jax
import jax.numpy as jnp
from jax.experimental import pallas as pl
from jax.experimental.pallas import tpu as pltpu


def _round_up(x, m):
    return ((x + m - 1) // m) * m


def _round_down(x, m):
    return (x // m) * m


def mlp_kernel(x_ref, w1_ref, b1_ref, w2_ref, b2_ref, w3_ref, b3_ref, o_ref):
    # x arrives as f32 straight from HBM; cast to the matmul dtype on the VPU
    # (hidden under the x-tile DMA; halves HBM traffic vs a wrapper-side cast).
    x = x_ref[...].astype(w1_ref.dtype)
    # fc1 + ReLU (MXU matmul, f32 accumulation; f32 epilogue on the VPU)
    h1 = jnp.dot(x, w1_ref[...], preferred_element_type=jnp.float32)
    h1 = jnp.maximum(h1 + b1_ref[...], 0.0).astype(w2_ref.dtype)
    # fc2 + ReLU
    h2 = jnp.dot(h1, w2_ref[...], preferred_element_type=jnp.float32)
    h2 = jnp.maximum(h2 + b2_ref[...], 0.0).astype(w3_ref.dtype)
    # fc3 (output padded to 128 lanes -> unmasked, lane-dense stores)
    o_ref[...] = (jnp.dot(h2, w3_ref[...], preferred_element_type=jnp.float32)
                  + b3_ref[...]).astype(o_ref.dtype)


def _pick_batch_tile(B, batch_tile, *, sub=16, min_tile=512, cap=2048):
    """Sublane-aligned batch tile.

    Never exceeds B (so no block is bigger than its array and no full-array pad copy
    is needed); capped at 2048 rows (f32 x double-buffer fits the scoped-VMEM default
    on all generations incl. v7x); aims for >=2 grid steps on mid/large batches so
    v7x's two TensorCores both get work, without shrinking a step below `min_tile`.
    """
    tb_max = _round_down(B, sub)
    if tb_max == 0:
        return B                      # tiny batch: one full-extent block
    hard_cap = min(_round_up(batch_tile, sub), cap)
    half = _round_up((B + 1) // 2, sub)
    return min(hard_cap, max(half, min(min_tile, tb_max)), tb_max)


def simple_net_forward(x, params, *, batch_tile=2048,
                       compute_dtype=jnp.bfloat16, out_dtype=jnp.float32):
    """Fused 3-layer MLP forward.  x: (B, 784) f32.  Returns (B, 10) in out_dtype."""
    w1, b1, w2, b2, w3, b3 = params
    B, D_in = x.shape
    D_h1, D_h2, D_out = w1.shape[1], w2.shape[1], w3.shape[1]

    # Lane-dense output: pad the last layer from 10 -> 128 columns.
    N_pad = _round_up(D_out, 128)
    w3p = jnp.zeros((w3.shape[0], N_pad), w3.dtype).at[:, :D_out].set(w3)
    b3p = jnp.zeros((1, N_pad), b3.dtype).at[:, :D_out].set(b3)

    # Only the (tiny) weights are pre-cast to the matmul dtype; x stays f32 in HBM and
    # is cast inside the kernel.  Biases stay f32 for the VPU epilogues.
    w1c, w2c, w3c = (w.astype(compute_dtype) for w in (w1, w2, w3p))
    b1f, b2f, b3f = (b.astype(jnp.float32) for b in (b1, b2, b3p))

    tb = _pick_batch_tile(B, batch_tile)
    grid = (pl.cdiv(B, tb),)
    # Output rows are padded to a whole number of tiles so every output store is
    # in-bounds; the ragged last *input* block is read with Pallas' boundary padding,
    # and the garbage output rows past B are sliced away below (no jnp.pad copy of x).
    B_out = grid[0] * tb

    x_map = lambda i: (i, 0)
    fixed_map = lambda i: (0, 0)

    out_itemsize = jnp.dtype(out_dtype).itemsize
    flops = 2 * B_out * (D_in * D_h1 + D_h1 * D_h2 + D_h2 * N_pad)
    bytes_accessed = (
        B * D_in * x.dtype.itemsize                      # x read once, as f32
        + sum(int(a.size) * a.dtype.itemsize
              for a in (w1c, b1f, w2c, b2f, w3c, b3f))   # resident weights/biases
        + B_out * N_pad * out_itemsize                   # lane-dense output writeback
    )
    cost = pl.CostEstimate(flops=flops, transcendentals=0,
                           bytes_accessed=bytes_accessed)

    out = pl.pallas_call(
        mlp_kernel,
        out_shape=jax.ShapeDtypeStruct((B_out, N_pad), out_dtype),
        grid_spec=pltpu.PrefetchScalarGridSpec(
            num_scalar_prefetch=0,
            grid=grid,
            in_specs=[
                pl.BlockSpec((tb, D_in), x_map),      # f32 x tile, pipelined per step
                pl.BlockSpec(w1c.shape, fixed_map),   # w1 (784,256), resident
                pl.BlockSpec(b1f.shape, fixed_map),   # b1 (1,256)
                pl.BlockSpec(w2c.shape, fixed_map),   # w2 (256,128)
                pl.BlockSpec(b2f.shape, fixed_map),   # b2 (1,128)
                pl.BlockSpec(w3c.shape, fixed_map),   # w3 (128,128), lane-padded
                pl.BlockSpec(b3f.shape, fixed_map),   # b3 (1,128), lane-padded
            ],
            out_specs=pl.BlockSpec((tb, N_pad), x_map),
        ),
        compiler_params=pltpu.CompilerParams(
            # Batch axis is embarrassingly parallel: shards across v7x's two TCs.
            dimension_semantics=("parallel",),
            # Default scoped VMEM is ample at tb<=2048 with f32 x tiles; do not raise.
        ),
        cost_estimate=cost,
    )(x, w1c, b1f, w2c, b2f, w3c, b3f)

    # Strip the batch tile padding and the lane padding of the last layer.
    return out[:B, :D_out]


def init_params(key, input_size=784):
    # Matches PyTorch nn.Linear default init U(-1/sqrt(fan_in), 1/sqrt(fan_in)).
    dims = [(input_size, 256), (256, 128), (128, 10)]
    params = []
    for fan_in, fan_out in dims:
        key, kw, kb = jax.random.split(key, 3)
        bound = 1.0 / jnp.sqrt(fan_in)
        w = jax.random.uniform(kw, (fan_in, fan_out), jnp.float32, -bound, bound)
        b = jax.random.uniform(kb, (1, fan_out), jnp.float32, -bound, bound)
        params += [w, b]
    return tuple(params)


def reference_forward(x, params):
    w1, b1, w2, b2, w3, b3 = params
    h1 = jnp.maximum(x @ w1 + b1, 0.0)
    h2 = jnp.maximum(h1 @ w2 + b2, 0.0)
    return h2 @ w3 + b3


if __name__ == "__main__":
    key = jax.random.PRNGKey(0)
    key, kx1, kx2 = jax.random.split(key, 3)

    input_size = 784
    params = init_params(key, input_size)

    # Small single-tile case (batch=8).
    x1 = jax.random.normal(kx1, (8, input_size), jnp.float32)
    ref1 = reference_forward(x1, params)

    # f32 compute path: exact-ish match (tight tolerance).
    out1_f32 = jax.block_until_ready(
        simple_net_forward(x1, params, compute_dtype=jnp.float32))
    assert out1_f32.shape == (8, 10)
    assert jnp.allclose(out1_f32, ref1, atol=1e-4, rtol=1e-4), "f32 path mismatch"

    # Default bf16 matmul path (f32 accumulation, cast-in-kernel): looser tolerance.
    out1_bf16 = jax.block_until_ready(simple_net_forward(x1, params))
    assert out1_bf16.shape == (8, 10)
    assert jnp.allclose(out1_bf16, ref1, atol=5e-2, rtol=5e-2), "bf16 path mismatch"

    # Multi-tile case exercising grid > 1 and a ragged last block (B=40, tile=16).
    x2 = jax.random.normal(kx2, (40, input_size), jnp.float32)
    ref2 = reference_forward(x2, params)
    out2 = jax.block_until_ready(simple_net_forward(x2, params, batch_tile=16))
    assert out2.shape == (40, 10)
    assert jnp.allclose(out2, ref2, atol=5e-2, rtol=5e-2), "multi-tile mismatch"

    # bf16 output writeback path (halves output HBM traffic).
    out3 = jax.block_until_ready(
        simple_net_forward(x2, params, batch_tile=16, out_dtype=jnp.bfloat16))
    assert out3.shape == (40, 10) and out3.dtype == jnp.bfloat16
    assert jnp.allclose(out3.astype(jnp.float32), ref2, atol=5e-2, rtol=5e-2), \
        "bf16 output mismatch"

    print("KERNEL_OK")
</pallas_src>

<mosaic_0001>
module attributes {stable_mosaic.version = 11 : i64} {
  func.func @mlp_kernel(%arg0: i32, %arg1: memref<8x784xf32, #tpu.memory_space<vmem>>, %arg2: memref<784x256xf32, #tpu.memory_space<vmem>>, %arg3: memref<1x256xf32, #tpu.memory_space<vmem>>, %arg4: memref<256x128xf32, #tpu.memory_space<vmem>>, %arg5: memref<1x128xf32, #tpu.memory_space<vmem>>, %arg6: memref<128x128xf32, #tpu.memory_space<vmem>>, %arg7: memref<1x128xf32, #tpu.memory_space<vmem>>, %arg8: memref<8x128xf32, #tpu.memory_space<vmem>>) attributes {dimension_semantics = [#tpu.dimension_semantics<parallel>], iteration_bounds = array<i64: 1>, scalar_prefetch = 0 : i64, scratch_operands = 0 : i64, tpu.core_type = #tpu.core_type<tc>, window_params = [{transform_indices = @transform_0, window_bounds = array<i64: 8, 784>}, {pipeline_mode = #tpu.pipeline_mode<synchronous>, transform_indices = @transform_1, window_bounds = array<i64: 784, 256>}, {pipeline_mode = #tpu.pipeline_mode<synchronous>, transform_indices = @transform_2, window_bounds = array<i64: 1, 256>}, {pipeline_mode = #tpu.pipeline_mode<synchronous>, transform_indices = @transform_3, window_bounds = array<i64: 256, 128>}, {pipeline_mode = #tpu.pipeline_mode<synchronous>, transform_indices = @transform_4, window_bounds = array<i64: 1, 128>}, {pipeline_mode = #tpu.pipeline_mode<synchronous>, transform_indices = @transform_5, window_bounds = array<i64: 128, 128>}, {pipeline_mode = #tpu.pipeline_mode<synchronous>, transform_indices = @transform_6, window_bounds = array<i64: 1, 128>}, {transform_indices = @transform_7, window_bounds = array<i64: 8, 128>}]} {
    %c0 = arith.constant 0 : index
    %c0_0 = arith.constant 0 : index
    %0 = vector.load %arg1[%c0, %c0_0] : memref<8x784xf32, #tpu.memory_space<vmem>>, vector<8x784xf32>
    %c0_1 = arith.constant 0 : index
    %c0_2 = arith.constant 0 : index
    %1 = vector.load %arg2[%c0_1, %c0_2] : memref<784x256xf32, #tpu.memory_space<vmem>>, vector<784x256xf32>
    %cst = arith.constant dense<0.000000e+00> : vector<8x256xf32>
    %2 = tpu.matmul %0, %1, %cst {dimension_numbers = #tpu.dot_dimension_numbers<[1], [0], [0], [1], [0, 0, 1, 1], [], []>} : vector<8x784xf32>, vector<784x256xf32>, vector<8x256xf32> -> vector<8x256xf32>
    %c0_3 = arith.constant 0 : index
    %c0_4 = arith.constant 0 : index
    %3 = vector.load %arg3[%c0_3, %c0_4] : memref<1x256xf32, #tpu.memory_space<vmem>>, vector<1x256xf32>
    %4 = vector.broadcast %3 : vector<1x256xf32> to vector<8x256xf32>
    %5 = arith.addf %2, %4 : vector<8x256xf32>
    %cst_5 = arith.constant 0.000000e+00 : f32
    %6 = vector.broadcast %cst_5 : f32 to vector<8x256xf32>
    %7 = arith.maximumf %5, %6 : vector<8x256xf32>
    %c0_6 = arith.constant 0 : index
    %c0_7 = arith.constant 0 : index
    %8 = vector.load %arg4[%c0_6, %c0_7] : memref<256x128xf32, #tpu.memory_space<vmem>>, vector<256x128xf32>
    %cst_8 = arith.constant dense<0.000000e+00> : vector<8x128xf32>
    %9 = tpu.matmul %7, %8, %cst_8 {dimension_numbers = #tpu.dot_dimension_numbers<[1], [0], [0], [1], [0, 0, 1, 1], [], []>} : vector<8x256xf32>, vector<256x128xf32>, vector<8x128xf32> -> vector<8x128xf32>
    %c0_9 = arith.constant 0 : index
    %c0_10 = arith.constant 0 : index
    %10 = vector.load %arg5[%c0_9, %c0_10] : memref<1x128xf32, #tpu.memory_space<vmem>>, vector<1x128xf32>
    %11 = vector.broadcast %10 : vector<1x128xf32> to vector<8x128xf32>
    %12 = arith.addf %9, %11 : vector<8x128xf32>
    %cst_11 = arith.constant 0.000000e+00 : f32
    %13 = vector.broadcast %cst_11 : f32 to vector<8x128xf32>
    %14 = arith.maximumf %12, %13 : vector<8x128xf32>
    %c0_12 = arith.constant 0 : index
    %c0_13 = arith.constant 0 : index
    %15 = vector.load %arg6[%c0_12, %c0_13] : memref<128x128xf32, #tpu.memory_space<vmem>>, vector<128x128xf32>
    %cst_14 = arith.constant dense<0.000000e+00> : vector<8x128xf32>
    %16 = tpu.matmul %14, %15, %cst_14 {dimension_numbers = #tpu.dot_dimension_numbers<[1], [0], [0], [1], [0, 0, 1, 1], [], []>} : vector<8x128xf32>, vector<128x128xf32>, vector<8x128xf32> -> vector<8x128xf32>
    %c0_15 = arith.constant 0 : index
    %c0_16 = arith.constant 0 : index
    %17 = vector.load %arg7[%c0_15, %c0_16] : memref<1x128xf32, #tpu.memory_space<vmem>>, vector<1x128xf32>
    %18 = vector.broadcast %17 : vector<1x128xf32> to vector<8x128xf32>
    %19 = arith.addf %16, %18 : vector<8x128xf32>
    %c0_17 = arith.constant 0 : index
    %c0_18 = arith.constant 0 : index
    %20 = vector.load %arg8[%c0_17, %c0_18] : memref<8x128xf32, #tpu.memory_space<vmem>>, vector<8x128xf32>
    tpu.vector_store %arg8[%c0_17, %c0_18], %19 {strides = array<i32>} : memref<8x128xf32, #tpu.memory_space<vmem>>, vector<8x128xf32>,
    return
  }
  func.func @transform_0(%arg0: i32) -> (i32, i32) {
    %c0_i32 = arith.constant 0 : i32
    %c0_i32_0 = arith.constant 0 : i32
    return %arg0, %c0_i32 : i32, i32
  }
  func.func @transform_1(%arg0: i32) -> (i32, i32) {
    %c0_i32 = arith.constant 0 : i32
    %c0_i32_0 = arith.constant 0 : i32
    %c0_i32_1 = arith.constant 0 : i32
    return %c0_i32, %c0_i32_0 : i32, i32
  }
  func.func @transform_2(%arg0: i32) -> (i32, i32) {
    %c0_i32 = arith.constant 0 : i32
    %c0_i32_0 = arith.constant 0 : i32
    %c0_i32_1 = arith.constant 0 : i32
    return %c0_i32, %c0_i32_0 : i32, i32
  }
  func.func @transform_3(%arg0: i32) -> (i32, i32) {
    %c0_i32 = arith.constant 0 : i32
    %c0_i32_0 = arith.constant 0 : i32
    %c0_i32_1 = arith.constant 0 : i32
    return %c0_i32, %c0_i32_0 : i32, i32
  }
  func.func @transform_4(%arg0: i32) -> (i32, i32) {
    %c0_i32 = arith.constant 0 : i32
    %c0_i32_0 = arith.constant 0 : i32
    %c0_i32_1 = arith.constant 0 : i32
    return %c0_i32, %c0_i32_0 : i32, i32
  }
  func.func @transform_5(%arg0: i32) -> (i32, i32) {
    %c0_i32 = arith.constant 0 : i32
    %c0_i32_0 = arith.constant 0 : i32
    %c0_i32_1 = arith.constant 0 : i32
    return %c0_i32, %c0_i32_0 : i32, i32
  }
  func.func @transform_6(%arg0: i32) -> (i32, i32) {
    %c0_i32 = arith.constant 0 : i32
    %c0_i32_0 = arith.constant 0 : i32
    %c0_i32_1 = arith.constant 0 : i32
    return %c0_i32, %c0_i32_0 : i32, i32
  }
  func.func @transform_7(%arg0: i32) -> (i32, i32) {
    %c0_i32 = arith.constant 0 : i32
    %c0_i32_0 = arith.constant 0 : i32
    return %arg0, %c0_i32 : i32, i32
  }
}

</mosaic_0001>

<llo_original>
// kernel: tpu_custom_call.1
$region0: #{tpu_custom_call.1}
  #allocation0 [shape = 'u32[]', space=smem, size = 0x4, offset = 0x4, fixed_abs, tag = 'smem constant byte address 0x4 - core index']
  #allocation1 [shape = 'u32[144,128]{1,0:T(1,128)}', space=vmem, size = 0x12000, scoped, tag = 'internal scratch']
  %s0 = inlined_call_operand.hbm [shape: f32[8,784], index: 0, kind: input, shape index: {}]
  %s1 = inlined_call_operand.hbm [shape: f32[784,256], index: 1, kind: input, shape index: {}]
  %s2 = inlined_call_operand.vmem [shape: f32[1,256], index: 2, kind: input, shape index: {}]
  %s3 = inlined_call_operand.hbm [shape: f32[256,128], index: 3, kind: input, shape index: {}]
  %s4 = inlined_call_operand.vmem [shape: f32[1,128], index: 4, kind: input, shape index: {}]
  %s5 = inlined_call_operand.hbm [shape: f32[128,128], index: 5, kind: input, shape index: {}]
  %s6 = inlined_call_operand.vmem [shape: f32[1,128], index: 6, kind: input, shape index: {}]
  %s7 = inlined_call_operand.hbm [shape: f32[8,128], index: 7, kind: output, shape index: {}]
  %s8 = sld [smem:[#allocation0]]
  $region54: #{tpu_custom_call.1} parent=0
    _
  %s10 = ssub.s32 1, %s8
  %s11 = scalar_select 0, %s10, %s8
  $region1: #{tpu_custom_call.1} parent=0
    #allocation2 [shape = 'u8[28672]{0}', space=vmem, size = 0x7000, scoped, tag = 'input window, operand 0, single buffered']
    #allocation3 [shape = 's32[1]{0}', space=sflag, size = 0x4, scoped, tag = 'scoped memory for tpu_custom_call.1']
    #allocation4 [shape = 's32[1]{0}', space=sflag, size = 0x4, scoped, tag = 'scoped memory for tpu_custom_call.1']
    #allocation5 [shape = 'u8[802816]{0}', space=vmem, size = 0xc4000, scoped, tag = 'input window, operand 1, single buffered']
    #allocation6 [shape = 's32[1]{0}', space=sflag, size = 0x4, scoped, tag = 'scoped memory for tpu_custom_call.1']
    #allocation7 [shape = 'u8[131072]{0}', space=vmem, size = 0x20000, scoped, tag = 'input window, operand 3, single buffered']
    #allocation8 [shape = 'u8[65536]{0}', space=vmem, size = 0x10000, scoped, tag = 'input window, operand 5, single buffered']
    #allocation9 [shape = 's32[1]{0}', space=sflag, size = 0x4, scoped, tag = 'scoped memory for tpu_custom_call.1']
    #allocation10 [shape = 'u8[4096]{0}', space=vmem, size = 0x1000, scoped, tag = 'output window, operand 0, single buffered']
    %12 = vsyncpa [#allocation3], 0
    %13 = vsyncpa [#allocation6], 0
    %14 = vsyncpa [#allocation9], 0
    %15 = vsyncpa [#allocation4], 0
    // Predicated region
    $region2: #{tpu_custom_call.1} parent=1 // pred_check
      _
    $region3: #{tpu_custom_call.1} parent=1 // pred_check_branch
      %17 = sbr.rel (0) target = $region5
    $region4: #{tpu_custom_call.1} parent=1 // pred_region
      %s19 = ssub.s32 896, 896
      %20 = vsyncadd [#allocation3], %s19
      %s22 = sshll.u32 [#allocation2], 4
      %s23 = int_to_ptr.vmem [resolvable:$true] %s22
      %25 = dma.hbm_to_vmem [thread:$0]  %s0, 896, %s23, [#allocation3]
    $region5: #{tpu_custom_call.1} parent=1 // pred_fallthru
      _
    // Predicated region
    $region6: #{tpu_custom_call.1} parent=1 // pred_check
      _
    $region7: #{tpu_custom_call.1} parent=1 // pred_check_branch
      %27 = sbr.rel (0) target = $region9
    $region8: #{tpu_custom_call.1} parent=1 // pred_region
      %s29 = ssub.s32 25088, 25088
      %30 = vsyncadd [#allocation6], %s29
      %s31 = sshll.u32 [#allocation5], 4
      %s32 = int_to_ptr.vmem [resolvable:$true] %s31
      %37 = dma.hbm_to_vmem [thread:$0]  %s1, 25088, %s32, [#allocation6], 256, 256, 16
    $region9: #{tpu_custom_call.1} parent=1 // pred_fallthru
      _
    // Predicated region
    $region10: #{tpu_custom_call.1} parent=1 // pred_check
      _
    $region11: #{tpu_custom_call.1} parent=1 // pred_check_branch
      %39 = sbr.rel (0) target = $region13
    $region12: #{tpu_custom_call.1} parent=1 // pred_region
      _
    $region13: #{tpu_custom_call.1} parent=1 // pred_fallthru
      _
    // Predicated region
    $region14: #{tpu_custom_call.1} parent=1 // pred_check
      _
    $region15: #{tpu_custom_call.1} parent=1 // pred_check_branch
      %41 = sbr.rel (0) target = $region17
    $region16: #{tpu_custom_call.1} parent=1 // pred_region
      %s43 = ssub.s32 4096, 4096
      %44 = vsyncadd [#allocation6], %s43
      %s45 = sshll.u32 [#allocation7], 4
      %s46 = int_to_ptr.vmem [resolvable:$true] %s45
      %51 = dma.hbm_to_vmem [thread:$0]  %s3, 4096, %s46, [#allocation6], 128, 128, 8
    $region17: #{tpu_custom_call.1} parent=1 // pred_fallthru
      _
    // Predicated region
    $region18: #{tpu_custom_call.1} parent=1 // pred_check
      _
    $region19: #{tpu_custom_call.1} parent=1 // pred_check_branch
      %53 = sbr.rel (0) target = $region21
    $region20: #{tpu_custom_call.1} parent=1 // pred_region
      _
    $region21: #{tpu_custom_call.1} parent=1 // pred_fallthru
      _
    // Predicated region
    $region22: #{tpu_custom_call.1} parent=1 // pred_check
      _
    $region23: #{tpu_custom_call.1} parent=1 // pred_check_branch
      %55 = sbr.rel (0) target = $region25
    $region24: #{tpu_custom_call.1} parent=1 // pred_region
      %s57 = ssub.s32 2048, 2048
      %58 = vsyncadd [#allocation9], %s57
      %s59 = sshll.u32 [#allocation8], 4
      %s60 = int_to_ptr.vmem [resolvable:$true] %s59
      %65 = dma.hbm_to_vmem [thread:$0]  %s5, 2048, %s60, [#allocation9], 128, 128, 8
    $region25: #{tpu_custom_call.1} parent=1 // pred_fallthru
      _
    // Predicated region
    $region26: #{tpu_custom_call.1} parent=1 // pred_check
      _
    $region27: #{tpu_custom_call.1} parent=1 // pred_check_branch
      %67 = sbr.rel (0) target = $region29
    $region28: #{tpu_custom_call.1} parent=1 // pred_region
      _
    $region29: #{tpu_custom_call.1} parent=1 // pred_fallthru
      _
    // Predicated region
    $region30: #{tpu_custom_call.1} parent=1 // pred_check
      _
    $region31: #{tpu_custom_call.1} parent=1 // pred_check_branch
      %69 = sbr.rel (0) target = $region33
    $region32: #{tpu_custom_call.1} parent=1 // pred_region
      %70 = dma.done [#allocation3], 896
    $region33: #{tpu_custom_call.1} parent=1 // pred_fallthru
      _
    // Predicated region
    $region34: #{tpu_custom_call.1} parent=1 // pred_check
      _
    $region35: #{tpu_custom_call.1} parent=1 // pred_check_branch
      %72 = sbr.rel (0) target = $region37
    $region36: #{tpu_custom_call.1} parent=1 // pred_region
      %73 = dma.done [#allocation6], 25088
    $region37: #{tpu_custom_call.1} parent=1 // pred_fallthru
      _
    // Predicated region
    $region38: #{tpu_custom_call.1} parent=1 // pred_check
      _
    $region39: #{tpu_custom_call.1} parent=1 // pred_check_branch
      %75 = sbr.rel (0) target = $region41
    $region40: #{tpu_custom_call.1} parent=1 // pred_region
      %76 = dma.done [#allocation6], 4096
    $region41: #{tpu_custom_call.1} parent=1 // pred_fallthru
      _
    // Predicated region
    $region42: #{tpu_custom_call.1} parent=1 // pred_check
      _
    $region43: #{tpu_custom_call.1} parent=1 // pred_check_branch
      %78 = sbr.rel (0) target = $region45
    $region44: #{tpu_custom_call.1} parent=1 // pred_region
      %79 = dma.done [#allocation9], 2048
    $region45: #{tpu_custom_call.1} parent=1 // pred_fallthru
      _
    %v80 = vld [vmem:[#allocation2] sm:$0xff]
    %v81 = vld [vmem:[#allocation2 + $0x8] sm:$0xff]
    %v82 = vld [vmem:[#allocation2 + $0x10] sm:$0xff]
    %v83 = vld [vmem:[#allocation2 + $0x18] sm:$0xff]
    %v84 = vld [vmem:[#allocation2 + $0x20] sm:$0xff]
    %v85 = vld [vmem:[#allocation2 + $0x28] sm:$0xff]
    %v86 = vld [vmem:[#allocation2 + $0x30] sm:$0xff]
    %v87 = vld [vmem:[#allocation5] sm:$0xff]
    %v88 = vld [vmem:[#allocation5 + $0x8] sm:$0xff]
    %v89 = vld [vmem:[#allocation5 + $0x10] sm:$0xff]
    %v90 = vld [vmem:[#allocation5 + $0x18] sm:$0xff]
    %v91 = vld [vmem:[#allocation5 + $0x20] sm:$0xff]
    %v92 = vld [vmem:[#allocation5 + $0x28] sm:$0xff]
    %v93 = vld [vmem:[#allocation5 + $0x30] sm:$0xff]
    %v94 = vld [vmem:[#allocation5 + $0x38] sm:$0xff]
    %v95 = vld [vmem:[#allocation5 + $0x40] sm:$0xff]
    %v96 = vld [vmem:[#allocation5 + $0x48] sm:$0xff]
    %v97 = vld [vmem:[#allocation5 + $0x50] sm:$0xff]
    %v98 = vld [vmem:[#allocation5 + $0x58] sm:$0xff]
    %v99 = vld [vmem:[#allocation5 + $0x60] sm:$0xff]
    %v100 = vld [vmem:[#allocation5 + $0x68] sm:$0xff]
    %v101 = vld [vmem:[#allocation5 + $0x70] sm:$0xff]
    %v102 = vld [vmem:[#allocation5 + $0x78] sm:$0xff]
    %v103 = vld [vmem:[#allocation5 + $0x80] sm:$0xff]
    %v104 = vld [vmem:[#allocation5 + $0x88] sm:$0xff]
    %v105 = vld [vmem:[#allocation5 + $0x90] sm:$0xff]
    %v106 = vld [vmem:[#allocation5 + $0x98] sm:$0xff]
    %v107 = vld [vmem:[#allocation5 + $0xa0] sm:$0xff]
    %v108 = vld [vmem:[#allocation5 + $0xa8] sm:$0xff]
    %v109 = vld [vmem:[#allocation5 + $0xb0] sm:$0xff]
    %v110 = vld [vmem:[#allocation5 + $0xb8] sm:$0xff]
    %v111 = vld [vmem:[#allocation5 + $0xc0] sm:$0xff]
    %v112 = vld [vmem:[#allocation5 + $0xc8] sm:$0xff]
    %v113 = vld [vmem:[#allocation5 + $0xd0] sm:$0xff]
    %v114 = vld [vmem:[#allocation5 + $0xd8] sm:$0xff]
    %v115 = vld [vmem:[#allocation5 + $0xe0] sm:$0xff]
    %v116 = vld [vmem:[#allocation5 + $0xe8] sm:$0xff]
    %v117 = vld [vmem:[#allocation5 + $0xf0] sm:$0xff]
    %v118 = vld [vmem:[#allocation5 + $0xf8] sm:$0xff]
    %v119 = vld [vmem:[#allocation5 + $0x100] sm:$0xff]
    %v120 = vld [vmem:[#allocation5 + $0x108] sm:$0xff]
    %v121 = vld [vmem:[#allocation5 + $0x110] sm:$0xff]
    %v122 = vld [vmem:[#allocation5 + $0x118] sm:$0xff]
    %v123 = vld [vmem:[#allocation5 + $0x120] sm:$0xff]
    %v124 = vld [vmem:[#allocation5 + $0x128] sm:$0xff]
    %v125 = vld [vmem:[#allocation5 + $0x130] sm:$0xff]
    %v126 = vld [vmem:[#allocation5 + $0x138] sm:$0xff]
    %v127 = vld [vmem:[#allocation5 + $0x140] sm:$0xff]
    %v128 = vld [vmem:[#allocation5 + $0x148] sm:$0xff]
    %v129 = vld [vmem:[#allocation5 + $0x150] sm:$0xff]
    %v130 = vld [vmem:[#allocation5 + $0x158] sm:$0xff]
    %v131 = vld [vmem:[#allocation5 + $0x160] sm:$0xff]
    %v132 = vld [vmem:[#allocation5 + $0x168] sm:$0xff]
    %v133 = vld [vmem:[#allocation5 + $0x170] sm:$0xff]
    %v134 = vld [vmem:[#allocation5 + $0x178] sm:$0xff]
    %v135 = vld [vmem:[#allocation5 + $0x180] sm:$0xff]
    %v136 = vld [vmem:[#allocation5 + $0x188] sm:$0xff]
    %v137 = vld [vmem:[#allocation5 + $0x190] sm:$0xff]
    %v138 = vld [vmem:[#allocation5 + $0x198] sm:$0xff]
    %v139 = vld [vmem:[#allocation5 + $0x1a0] sm:$0xff]
    %v140 = vld [vmem:[#allocation5 + $0x1a8] sm:$0xff]
    %v141 = vld [vmem:[#allocation5 + $0x1b0] sm:$0xff]
    %v142 = vld [vmem:[#allocation5 + $0x1b8] sm:$0xff]
    %v143 = vld [vmem:[#allocation5 + $0x1c0] sm:$0xff]
    %v144 = vld [vmem:[#allocation5 + $0x1c8] sm:$0xff]
    %v145 = vld [vmem:[#allocation5 + $0x1d0] sm:$0xff]
    %v146 = vld [vmem:[#allocation5 + $0x1d8] sm:$0xff]
    %v147 = vld [vmem:[#allocation5 + $0x1e0] sm:$0xff]
    %v148 = vld [vmem:[#allocation5 + $0x1e8] sm:$0xff]
    %v149 = vld [vmem:[#allocation5 + $0x1f0] sm:$0xff]
    %v150 = vld [vmem:[#allocation5 + $0x1f8] sm:$0xff]
    %v151 = vld [vmem:[#allocation5 + $0x200] sm:$0xff]
    %v152 = vld [vmem:[#allocation5 + $0x208] sm:$0xff]
    %v153 = vld [vmem:[#allocation5 + $0x210] sm:$0xff]
    %v154 = vld [vmem:[#allocation5 + $0x218] sm:$0xff]
    %v155 = vld [vmem:[#allocation5 + $0x220] sm:$0xff]
    %v156 = vld [vmem:[#allocation5 + $0x228] sm:$0xff]
    %v157 = vld [vmem:[#allocation5 + $0x230] sm:$0xff]
    %v158 = vld [vmem:[#allocation5 + $0x238] sm:$0xff]
    %v159 = vld [vmem:[#allocation5 + $0x240] sm:$0xff]
    %v160 = vld [vmem:[#allocation5 + $0x248] sm:$0xff]
    %v161 = vld [vmem:[#allocation5 + $0x250] sm:$0xff]
    %v162 = vld [vmem:[#allocation5 + $0x258] sm:$0xff]
    %v163 = vld [vmem:[#allocation5 + $0x260] sm:$0xff]
    %v164 = vld [vmem:[#allocation5 + $0x268] sm:$0xff]
    %v165 = vld [vmem:[#allocation5 + $0x270] sm:$0xff]
    %v166 = vld [vmem:[#allocation5 + $0x278] sm:$0xff]
    %v167 = vld [vmem:[#allocation5 + $0x280] sm:$0xff]
    %v168 = vld [vmem:[#allocation5 + $0x288] sm:$0xff]
    %v169 = vld [vmem:[#allocation5 + $0x290] sm:$0xff]
    %v170 = vld [vmem:[#allocation5 + $0x298] sm:$0xff]
    %v171 = vld [vmem:[#allocation5 + $0x2a0] sm:$0xff]
    %v172 = vld [vmem:[#allocation5 + $0x2a8] sm:$0xff]
    %v173 = vld [vmem:[#allocation5 + $0x2b0] sm:$0xff]
    %v174 = vld [vmem:[#allocation5 + $0x2b8] sm:$0xff]
    %v175 = vld [vmem:[#allocation5 + $0x2c0] sm:$0xff]
    %v176 = vld [vmem:[#allocation5 + $0x2c8] sm:$0xff]
    %v177 = vld [vmem:[#allocation5 + $0x2d0] sm:$0xff]
    %v178 = vld [vmem:[#allocation5 + $0x2d8] sm:$0xff]
    %v179 = vld [vmem:[#allocation5 + $0x2e0] sm:$0xff]
    %v180 = vld [vmem:[#allocation5 + $0x2e8] sm:$0xff]
    %v181 = vld [vmem:[#allocation5 + $0x2f0] sm:$0xff]
    %v182 = vld [vmem:[#allocation5 + $0x2f8] sm:$0xff]
    %v183 = vld [vmem:[#allocation5 + $0x300] sm:$0xff]
    %v184 = vld [vmem:[#allocation5 + $0x308] sm:$0xff]
    %v185 = vld [vmem:[#allocation5 + $0x310] sm:$0xff]
    %v186 = vld [vmem:[#allocation5 + $0x318] sm:$0xff]
    %v187 = vld [vmem:[#allocation5 + $0x320] sm:$0xff]
    %v188 = vld [vmem:[#allocation5 + $0x328] sm:$0xff]
    %v189 = vld [vmem:[#allocation5 + $0x330] sm:$0xff]
    %v190 = vld [vmem:[#allocation5 + $0x338] sm:$0xff]
    %v191 = vld [vmem:[#allocation5 + $0x340] sm:$0xff]
    %v192 = vld [vmem:[#allocation5 + $0x348] sm:$0xff]
    %v193 = vld [vmem:[#allocation5 + $0x350] sm:$0xff]
    %v194 = vld [vmem:[#allocation5 + $0x358] sm:$0xff]
    %v195 = vld [vmem:[#allocation5 + $0x360] sm:$0xff]
    %v196 = vld [vmem:[#allocation5 + $0x368] sm:$0xff]
    %v197 = vld [vmem:[#allocation5 + $0x370] sm:$0xff]
    %v198 = vld [vmem:[#allocation5 + $0x378] sm:$0xff]
    %v199 = vld [vmem:[#allocation5 + $0x380] sm:$0xff]
    %v200 = vld [vmem:[#allocation5 + $0x388] sm:$0xff]
    %v201 = vld [vmem:[#allocation5 + $0x390] sm:$0xff]
    %v202 = vld [vmem:[#allocation5 + $0x398] sm:$0xff]
    %v203 = vld [vmem:[#allocation5 + $0x3a0] sm:$0xff]
    %v204 = vld [vmem:[#allocation5 + $0x3a8] sm:$0xff]
    %v205 = vld [vmem:[#allocation5 + $0x3b0] sm:$0xff]
    %v206 = vld [vmem:[#allocation5 + $0x3b8] sm:$0xff]
    %v207 = vld [vmem:[#allocation5 + $0x3c0] sm:$0xff]
    %v208 = vld [vmem:[#allocation5 + $0x3c8] sm:$0xff]
    %v209 = vld [vmem:[#allocation5 + $0x3d0] sm:$0xff]
    %v210 = vld [vmem:[#allocation5 + $0x3d8] sm:$0xff]
    %v211 = vld [vmem:[#allocation5 + $0x3e0] sm:$0xff]
    %v212 = vld [vmem:[#allocation5 + $0x3e8] sm:$0xff]
    %v213 = vld [vmem:[#allocation5 + $0x3f0] sm:$0xff]
    %v214 = vld [vmem:[#allocation5 + $0x3f8] sm:$0xff]
    %v215 = vld [vmem:[#allocation5 + $0x400] sm:$0xff]
    %v216 = vld [vmem:[#allocation5 + $0x408] sm:$0xff]
    %v217 = vld [vmem:[#allocation5 + $0x410] sm:$0xff]
    %v218 = vld [vmem:[#allocation5 + $0x418] sm:$0xff]
    %v219 = vld [vmem:[#allocation5 + $0x420] sm:$0xff]
    %v220 = vld [vmem:[#allocation5 + $0x428] sm:$0xff]
    %v221 = vld [vmem:[#allocation5 + $0x430] sm:$0xff]
    %v222 = vld [vmem:[#allocation5 + $0x438] sm:$0xff]
    %v223 = vld [vmem:[#allocation5 + $0x440] sm:$0xff]
    %v224 = vld [vmem:[#allocation5 + $0x448] sm:$0xff]
    %v225 = vld [vmem:[#allocation5 + $0x450] sm:$0xff]
    %v226 = vld [vmem:[#allocation5 + $0x458] sm:$0xff]
    %v227 = vld [vmem:[#allocation5 + $0x460] sm:$0xff]
    %v228 = vld [vmem:[#allocation5 + $0x468] sm:$0xff]
    %v229 = vld [vmem:[#allocation5 + $0x470] sm:$0xff]
    %v230 = vld [vmem:[#allocation5 + $0x478] sm:$0xff]
    %v231 = vld [vmem:[#allocation5 + $0x480] sm:$0xff]
    %v232 = vld [vmem:[#allocation5 + $0x488] sm:$0xff]
    %v233 = vld [vmem:[#allocation5 + $0x490] sm:$0xff]
    %v234 = vld [vmem:[#allocation5 + $0x498] sm:$0xff]
    %v235 = vld [vmem:[#allocation5 + $0x4a0] sm:$0xff]
    %v236 = vld [vmem:[#allocation5 + $0x4a8] sm:$0xff]
    %v237 = vld [vmem:[#allocation5 + $0x4b0] sm:$0xff]
    %v238 = vld [vmem:[#allocation5 + $0x4b8] sm:$0xff]
    %v239 = vld [vmem:[#allocation5 + $0x4c0] sm:$0xff]
    %v240 = vld [vmem:[#allocation5 + $0x4c8] sm:$0xff]
    %v241 = vld [vmem:[#allocation5 + $0x4d0] sm:$0xff]
    %v242 = vld [vmem:[#allocation5 + $0x4d8] sm:$0xff]
    %v243 = vld [vmem:[#allocation5 + $0x4e0] sm:$0xff]
    %v244 = vld [vmem:[#allocation5 + $0x4e8] sm:$0xff]
    %v245 = vld [vmem:[#allocation5 + $0x4f0] sm:$0xff]
    %v246 = vld [vmem:[#allocation5 + $0x4f8] sm:$0xff]
    %v247 = vld [vmem:[#allocation5 + $0x500] sm:$0xff]
    %v248 = vld [vmem:[#allocation5 + $0x508] sm:$0xff]
    %v249 = vld [vmem:[#allocation5 + $0x510] sm:$0xff]
    %v250 = vld [vmem:[#allocation5 + $0x518] sm:$0xff]
    %v251 = vld [vmem:[#allocation5 + $0x520] sm:$0xff]
    %v252 = vld [vmem:[#allocation5 + $0x528] sm:$0xff]
    %v253 = vld [vmem:[#allocation5 + $0x530] sm:$0xff]
    %v254 = vld [vmem:[#allocation5 + $0x538] sm:$0xff]
    %v255 = vld [vmem:[#allocation5 + $0x540] sm:$0xff]
    %v256 = vld [vmem:[#allocation5 + $0x548] sm:$0xff]
    %v257 = vld [vmem:[#allocation5 + $0x550] sm:$0xff]
    %v258 = vld [vmem:[#allocation5 + $0x558] sm:$0xff]
    %v259 = vld [vmem:[#allocation5 + $0x560] sm:$0xff]
    %v260 = vld [vmem:[#allocation5 + $0x568] sm:$0xff]
    %v261 = vld [vmem:[#allocation5 + $0x570] sm:$0xff]
    %v262 = vld [vmem:[#allocation5 + $0x578] sm:$0xff]
    %v263 = vld [vmem:[#allocation5 + $0x580] sm:$0xff]
    %v264 = vld [vmem:[#allocation5 + $0x588] sm:$0xff]
    %v265 = vld [vmem:[#allocation5 + $0x590] sm:$0xff]
    %v266 = vld [vmem:[#allocation5 + $0x598] sm:$0xff]
    %v267 = vld [vmem:[#allocation5 + $0x5a0] sm:$0xff]
    %v268 = vld [vmem:[#allocation5 + $0x5a8] sm:$0xff]
    %v269 = vld [vmem:[#allocation5 + $0x5b0] sm:$0xff]
    %v270 = vld [vmem:[#allocation5 + $0x5b8] sm:$0xff]
    %v271 = vld [vmem:[#allocation5 + $0x5c0] sm:$0xff]
    %v272 = vld [vmem:[#allocation5 + $0x5c8] sm:$0xff]
    %v273 = vld [vmem:[#allocation5 + $0x5d0] sm:$0xff]
    %v274 = vld [vmem:[#allocation5 + $0x5d8] sm:$0xff]
    %v275 = vld [vmem:[#allocation5 + $0x5e0] sm:$0xff]
    %v276 = vld [vmem:[#allocation5 + $0x5e8] sm:$0xff]
    %v277 = vld [vmem:[#allocation5 + $0x5f0] sm:$0xff]
    %v278 = vld [vmem:[#allocation5 + $0x5f8] sm:$0xff]
    %v279 = vld [vmem:[#allocation5 + $0x600] sm:$0xff]
    %v280 = vld [vmem:[#allocation5 + $0x608] sm:$0xff]
    %v281 = vld [vmem:[#allocation5 + $0x610] sm:$0xff]
    %v282 = vld [vmem:[#allocation5 + $0x618] sm:$0xff]
    %v283 = vld [vmem:[%s2] sm:$0x3]
    %v285 = vlaneseq
    %v286 = vshrl.u32 %v285, 7
    %v287 = vsub.s32 0, %v286
    %v288 = vrot.slane %v283, %v287
    %v289 = vlaneseq
    %v290 = vshrl.u32 %v289, 7
    %v291 = vsub.s32 1, %v290
    %v292 = vrot.slane %v283, %v291
    %vm295 = vcmask 130048
    %v297 = vsel %vm295, %v86, 0
    %299 = vmatprep.subr.mxu0 %v88
    %300 = vmatpush1.msra.mxu0 %v87
    %301 = vmatprep.subr.mxu0 %v90
    %302 = vmatpush1.msra.mxu0 %v89
    %303 = vmatprep.subr.mxu0 %v92
    %304 = vmatpush1.msra.mxu0 %v91
    %305 = vmatprep.subr.mxu0 %v94
    %306 = vmatpush1.msra.mxu0 %v93
    %307 = vmatprep.subr.mxu0 %v96
    %308 = vmatpush1.msra.mxu0 %v95
    %309 = vmatprep.subr.mxu0 %v98
    %310 = vmatpush1.msra.mxu0 %v97
    %311 = vmatprep.subr.mxu0 %v100
    %312 = vmatpush1.msra.mxu0 %v99
    %313 = vmatprep.subr.mxu0 %v102
    %314 = vmatpush1.msra.mxu0 %v101
    %315 = vmatprep.subr.mxu0 %v104
    %316 = vmatpush1.msra.mxu0 %v103
    %317 = vmatprep.subr.mxu0 %v106
    %318 = vmatpush1.msra.mxu0 %v105
    %319 = vmatprep.subr.mxu0 %v108
    %320 = vmatpush1.msra.mxu0 %v107
    %321 = vmatprep.subr.mxu0 %v110
    %322 = vmatpush1.msra.mxu0 %v109
    %323 = vmatprep.subr.mxu0 %v112
    %324 = vmatpush1.msra.mxu0 %v111
    %325 = vmatprep.subr.mxu0 %v114
    %326 = vmatpush1.msra.mxu0 %v113
    %327 = vmatprep.subr.mxu0 %v116
    %328 = vmatpush1.msra.mxu0 %v115
    %329 = vmatprep.subr.mxu0 %v118
    %330 = vmatpush1.msra.mxu0 %v117
    %331 = vmatprep.subr.mxu0 %v120
    %332 = vmatpush1.msra.mxu0 %v119
    %333 = vmatprep.subr.mxu0 %v122
    %334 = vmatpush1.msra.mxu0 %v121
    %335 = vmatprep.subr.mxu0 %v124
    %336 = vmatpush1.msra.mxu0 %v123
    %337 = vmatprep.subr.mxu0 %v126
    %338 = vmatpush1.msra.mxu0 %v125
    %339 = vmatprep.subr.mxu0 %v128
    %340 = vmatpush1.msra.mxu0 %v127
    %341 = vmatprep.subr.mxu0 %v130
    %342 = vmatpush1.msra.mxu0 %v129
    %343 = vmatprep.subr.mxu0 %v132
    %344 = vmatpush1.msra.mxu0 %v131
    %345 = vmatprep.subr.mxu0 %v134
    %346 = vmatpush1.msra.mxu0 %v133
    %347 = vmatprep.subr.mxu0 %v136
    %348 = vmatpush1.msra.mxu0 %v135
    %349 = vmatprep.subr.mxu0 %v138
    %350 = vmatpush1.msra.mxu0 %v137
    %351 = vmatprep.subr.mxu0 %v140
    %352 = vmatpush1.msra.mxu0 %v139
    %353 = vmatprep.subr.mxu0 %v142
    %354 = vmatpush1.msra.mxu0 %v141
    %355 = vmatprep.subr.mxu0 %v144
    %356 = vmatpush1.msra.mxu0 %v143
    %357 = vmatprep.subr.mxu0 %v146
    %358 = vmatpush1.msra.mxu0 %v145
    %359 = vmatprep.subr.mxu0 %v148
    %360 = vmatpush1.msra.mxu0 %v147
    %361 = vmatprep.subr.mxu0 %v150
    %362 = vmatpush1.msra.mxu0 %v149
    %363 = vmatprep.mubr.f32.mxu0 %v81
    %364 = vmatmul.mubr.f32.gmra.mrb[0].mxu0 %v80
    %v365 = vpop.f32.mrb[0].mxu0
    %v366 = vadd.f32 %v288, %v365
    %v367 = vpop.f32.mrb[0].mxu0
    %v368 = vadd.f32 %v292, %v367
    %369 = vdwg.mxu0
    %370 = vmatprep.subr.mxu0 %v152
    %371 = vmatpush1.msra.mxu0 %v151
    %372 = vmatprep.subr.mxu0 %v154
    %373 = vmatpush1.msra.mxu0 %v153
    %374 = vmatprep.subr.mxu0 %v156
    %375 = vmatpush1.msra.mxu0 %v155
    %376 = vmatprep.subr.mxu0 %v158
    %377 = vmatpush1.msra.mxu0 %v157
    %378 = vmatprep.subr.mxu0 %v160
    %379 = vmatpush1.msra.mxu0 %v159
    %380 = vmatprep.subr.mxu0 %v162
    %381 = vmatpush1.msra.mxu0 %v161
    %382 = vmatprep.subr.mxu0 %v164
    %383 = vmatpush1.msra.mxu0 %v163
    %384 = vmatprep.subr.mxu0 %v166
    %385 = vmatpush1.msra.mxu0 %v165
    %386 = vmatprep.subr.mxu0 %v168
    %387 = vmatpush1.msra.mxu0 %v167
    %388 = vmatprep.subr.mxu0 %v170
    %389 = vmatpush1.msra.mxu0 %v169
    %390 = vmatprep.subr.mxu0 %v172
    %391 = vmatpush1.msra.mxu0 %v171
    %392 = vmatprep.subr.mxu0 %v174
    %393 = vmatpush1.msra.mxu0 %v173
    %394 = vmatprep.subr.mxu0 %v176
    %395 = vmatpush1.msra.mxu0 %v175
    %396 = vmatprep.subr.mxu0 %v178
    %397 = vmatpush1.msra.mxu0 %v177
    %398 = vmatprep.subr.mxu0 %v180
    %399 = vmatpush1.msra.mxu0 %v179
    %400 = vmatprep.subr.mxu0 %v182
    %401 = vmatpush1.msra.mxu0 %v181
    %402 = vmatprep.subr.mxu0 %v184
    %403 = vmatpush1.msra.mxu0 %v183
    %404 = vmatprep.subr.mxu0 %v186
    %405 = vmatpush1.msra.mxu0 %v185
    %406 = vmatprep.subr.mxu0 %v188
    %407 = vmatpush1.msra.mxu0 %v187
    %408 = vmatprep.subr.mxu0 %v190
    %409 = vmatpush1.msra.mxu0 %v189
    %410 = vmatprep.subr.mxu0 %v192
    %411 = vmatpush1.msra.mxu0 %v191
    %412 = vmatprep.subr.mxu0 %v194
    %413 = vmatpush1.msra.mxu0 %v193
    %414 = vmatprep.subr.mxu0 %v196
    %415 = vmatpush1.msra.mxu0 %v195
    %416 = vmatprep.subr.mxu0 %v198
    %417 = vmatpush1.msra.mxu0 %v197
    %418 = vmatprep.subr.mxu0 %v200
    %419 = vmatpush1.msra.mxu0 %v199
    %420 = vmatprep.subr.mxu0 %v202
    %421 = vmatpush1.msra.mxu0 %v201
    %422 = vmatprep.subr.mxu0 %v204
    %423 = vmatpush1.msra.mxu0 %v203
    %424 = vmatprep.subr.mxu0 %v206
    %425 = vmatpush1.msra.mxu0 %v205
    %426 = vmatprep.subr.mxu0 %v208
    %427 = vmatpush1.msra.mxu0 %v207
    %428 = vmatprep.subr.mxu0 %v210
    %429 = vmatpush1.msra.mxu0 %v209
    %430 = vmatprep.subr.mxu0 %v212
    %431 = vmatpush1.msra.mxu0 %v211
    %432 = vmatprep.subr.mxu0 %v214
    %433 = vmatpush1.msra.mxu0 %v213
    %434 = vmatprep.mubr.f32.mxu0 %v83
    %435 = vmatmul.mubr.f32.gmra.mrb[0].mxu0 %v82
    %v436 = vpop.f32.mrb[0].mxu0
    %v437 = vadd.f32 %v366, %v436
    %v438 = vpop.f32.mrb[0].mxu0
    %v439 = vadd.f32 %v368, %v438
    %440 = vdwg.mxu0
    %441 = vmatprep.subr.mxu0 %v216
    %442 = vmatpush1.msra.mxu0 %v215
    %443 = vmatprep.subr.mxu0 %v218
    %444 = vmatpush1.msra.mxu0 %v217
    %445 = vmatprep.subr.mxu0 %v220
    %446 = vmatpush1.msra.mxu0 %v219
    %447 = vmatprep.subr.mxu0 %v222
    %448 = vmatpush1.msra.mxu0 %v221
    %449 = vmatprep.subr.mxu0 %v224
    %450 = vmatpush1.msra.mxu0 %v223
    %451 = vmatprep.subr.mxu0 %v226
    %452 = vmatpush1.msra.mxu0 %v225
    %453 = vmatprep.subr.mxu0 %v228
    %454 = vmatpush1.msra.mxu0 %v227
    %455 = vmatprep.subr.mxu0 %v230
    %456 = vmatpush1.msra.mxu0 %v229
    %457 = vmatprep.subr.mxu0 %v232
    %458 = vmatpush1.msra.mxu0 %v231
    %459 = vmatprep.subr.mxu0 %v234
    %460 = vmatpush1.msra.mxu0 %v233
    %461 = vmatprep.subr.mxu0 %v236
    %462 = vmatpush1.msra.mxu0 %v235
    %463 = vmatprep.subr.mxu0 %v238
    %464 = vmatpush1.msra.mxu0 %v237
    %465 = vmatprep.subr.mxu0 %v240
    %466 = vmatpush1.msra.mxu0 %v239
    %467 = vmatprep.subr.mxu0 %v242
    %468 = vmatpush1.msra.mxu0 %v241
    %469 = vmatprep.subr.mxu0 %v244
    %470 = vmatpush1.msra.mxu0 %v243
    %471 = vmatprep.subr.mxu0 %v246
    %472 = vmatpush1.msra.mxu0 %v245
    %473 = vmatprep.subr.mxu0 %v248
    %474 = vmatpush1.msra.mxu0 %v247
    %475 = vmatprep.subr.mxu0 %v250
    %476 = vmatpush1.msra.mxu0 %v249
    %477 = vmatprep.subr.mxu0 %v252
    %478 = vmatpush1.msra.mxu0 %v251
    %479 = vmatprep.subr.mxu0 %v254
    %480 = vmatpush1.msra.mxu0 %v253
    %481 = vmatprep.subr.mxu0 %v256
    %482 = vmatpush1.msra.mxu0 %v255
    %483 = vmatprep.subr.mxu0 %v258
    %484 = vmatpush1.msra.mxu0 %v257
    %485 = vmatprep.subr.mxu0 %v260
    %486 = vmatpush1.msra.mxu0 %v259
    %487 = vmatprep.subr.mxu0 %v262
    %488 = vmatpush1.msra.mxu0 %v261
    %489 = vmatprep.subr.mxu0 %v264
    %490 = vmatpush1.msra.mxu0 %v263
    %491 = vmatprep.subr.mxu0 %v266
    %492 = vmatpush1.msra.mxu0 %v265
    %493 = vmatprep.subr.mxu0 %v268
    %494 = vmatpush1.msra.mxu0 %v267
    %495 = vmatprep.subr.mxu0 %v270
    %496 = vmatpush1.msra.mxu0 %v269
    %497 = vmatprep.subr.mxu0 %v272
    %498 = vmatpush1.msra.mxu0 %v271
    %499 = vmatprep.subr.mxu0 %v274
    %500 = vmatpush1.msra.mxu0 %v273
    %501 = vmatprep.subr.mxu0 %v276
    %502 = vmatpush1.msra.mxu0 %v275
    %503 = vmatprep.subr.mxu0 %v278
    %504 = vmatpush1.msra.mxu0 %v277
    %505 = vmatprep.mubr.f32.mxu0 %v85
    %506 = vmatmul.mubr.f32.gmra.mrb[0].mxu0 %v84
    %v507 = vpop.f32.mrb[0].mxu0
    %v508 = vadd.f32 %v437, %v507
    %v509 = vpop.f32.mrb[0].mxu0
    %v510 = vadd.f32 %v439, %v509
    %511 = vdwg.mxu0
    %512 = vmatprep.subr.mxu0 %v280
    %513 = vmatpush1.msra.mxu0 %v279
    %514 = vmatprep.subr.mxu0 %v282
    %515 = vmatpush1.msra.mxu0 %v281
    %516 = vmatprep.subr.mxu0 0.0
    %517 = vmatpush1.msra.mxu0 0.0
    %518 = vmatprep.subr.mxu0 0.0
    %519 = vmatpush1.msra.mxu0 0.0
    %520 = vmatprep.subr.mxu0 0.0
    %521 = vmatpush1.msra.mxu0 0.0
    %522 = vmatprep.subr.mxu0 0.0
    %523 = vmatpush1.msra.mxu0 0.0
    %524 = vmatprep.subr.mxu0 0.0
    %525 = vmatpush1.msra.mxu0 0.0
    %526 = vmatprep.subr.mxu0 0.0
    %527 = vmatpush1.msra.mxu0 0.0
    %528 = vmatprep.subr.mxu0 0.0
    %529 = vmatpush1.msra.mxu0 0.0
    %530 = vmatprep.subr.mxu0 0.0
    %531 = vmatpush1.msra.mxu0 0.0
    %532 = vmatprep.subr.mxu0 0.0
    %533 = vmatpush1.msra.mxu0 0.0
    %534 = vmatprep.subr.mxu0 0.0
    %535 = vmatpush1.msra.mxu0 0.0
    %536 = vmatprep.subr.mxu0 0.0
    %537 = vmatpush1.msra.mxu0 0.0
    %538 = vmatprep.subr.mxu0 0.0
    %539 = vmatpush1.msra.mxu0 0.0
    %540 = vmatprep.subr.mxu0 0.0
    %541 = vmatpush1.msra.mxu0 0.0
    %542 = vmatprep.subr.mxu0 0.0
    %543 = vmatpush1.msra.mxu0 0.0
    %544 = vmatprep.subr.mxu0 0.0
    %545 = vmatpush1.msra.mxu0 0.0
    %546 = vmatprep.subr.mxu0 0.0
    %547 = vmatpush1.msra.mxu0 0.0
    %548 = vmatprep.subr.mxu0 0.0
    %549 = vmatpush1.msra.mxu0 0.0
    %550 = vmatprep.subr.mxu0 0.0
    %551 = vmatpush1.msra.mxu0 0.0
    %552 = vmatprep.subr.mxu0 0.0
    %553 = vmatpush1.msra.mxu0 0.0
    %554 = vmatprep.subr.mxu0 0.0
    %555 = vmatpush1.msra.mxu0 0.0
    %556 = vmatprep.subr.mxu0 0.0
    %557 = vmatpush1.msra.mxu0 0.0
    %558 = vmatprep.subr.mxu0 0.0
    %559 = vmatpush1.msra.mxu0 0.0
    %560 = vmatprep.subr.mxu0 0.0
    %561 = vmatpush1.msra.mxu0 0.0
    %562 = vmatprep.subr.mxu0 0.0
    %563 = vmatpush1.msra.mxu0 0.0
    %564 = vmatprep.subr.mxu0 0.0
    %565 = vmatpush1.msra.mxu0 0.0
    %566 = vmatprep.subr.mxu0 0.0
    %567 = vmatpush1.msra.mxu0 0.0
    %568 = vmatprep.subr.mxu0 0.0
    %569 = vmatpush1.msra.mxu0 0.0
    %570 = vmatprep.subr.mxu0 0.0
    %571 = vmatpush1.msra.mxu0 0.0
    %572 = vmatprep.subr.mxu0 0.0
    %573 = vmatpush1.msra.mxu0 0.0
    %574 = vmatprep.subr.mxu0 0.0
    %575 = vmatpush1.msra.mxu0 0.0
    %576 = vmatprep.mubr.f32.mxu0 0.0
    %577 = vmatmul.mubr.f32.gmra.mrb[0].mxu0 %v297
    %v578 = vpop.f32.mrb[0].mxu0
    %v579 = vadd.f32 %v508, %v578
    %v580 = vpop.f32.mrb[0].mxu0
    %v581 = vadd.f32 %v510, %v580
    %582 = vdwg.mxu0
    %v583 = vmax.f32 %v579, 0.0
    %v584 = vmax.f32 %v581, 0.0
    %v585 = vld [vmem:[#allocation7] sm:$0xff]
    %v586 = vld [vmem:[#allocation7 + $0x8] sm:$0xff]
    %v587 = vld [vmem:[#allocation7 + $0x10] sm:$0xff]
    %v588 = vld [vmem:[#allocation7 + $0x18] sm:$0xff]
    %v589 = vld [vmem:[#allocation7 + $0x20] sm:$0xff]
    %v590 = vld [vmem:[#allocation7 + $0x28] sm:$0xff]
    %v591 = vld [vmem:[#allocation7 + $0x30] sm:$0xff]
    %v592 = vld [vmem:[#allocation7 + $0x38] sm:$0xff]
    %v593 = vld [vmem:[#allocation7 + $0x40] sm:$0xff]
    %v594 = vld [vmem:[#allocation7 + $0x48] sm:$0xff]
    %v595 = vld [vmem:[#allocation7 + $0x50] sm:$0xff]
    %v596 = vld [vmem:[#allocation7 + $0x58] sm:$0xff]
    %v597 = vld [vmem:[#allocation7 + $0x60] sm:$0xff]
    %v598 = vld [vmem:[#allocation7 + $0x68] sm:$0xff]
    %v599 = vld [vmem:[#allocation7 + $0x70] sm:$0xff]
    %v600 = vld [vmem:[#allocation7 + $0x78] sm:$0xff]
    %v601 = vld [vmem:[#allocation7 + $0x80] sm:$0xff]
    %v602 = vld [vmem:[#allocation7 + $0x88] sm:$0xff]
    %v603 = vld [vmem:[#allocation7 + $0x90] sm:$0xff]
    %v604 = vld [vmem:[#allocation7 + $0x98] sm:$0xff]
    %v605 = vld [vmem:[#allocation7 + $0xa0] sm:$0xff]
    %v606 = vld [vmem:[#allocation7 + $0xa8] sm:$0xff]
    %v607 = vld [vmem:[#allocation7 + $0xb0] sm:$0xff]
    %v608 = vld [vmem:[#allocation7 + $0xb8] sm:$0xff]
    %v609 = vld [vmem:[#allocation7 + $0xc0] sm:$0xff]
    %v610 = vld [vmem:[#allocation7 + $0xc8] sm:$0xff]
    %v611 = vld [vmem:[#allocation7 + $0xd0] sm:$0xff]
    %v612 = vld [vmem:[#allocation7 + $0xd8] sm:$0xff]
    %v613 = vld [vmem:[#allocation7 + $0xe0] sm:$0xff]
    %v614 = vld [vmem:[#allocation7 + $0xe8] sm:$0xff]
    %v615 = vld [vmem:[#allocation7 + $0xf0] sm:$0xff]
    %v616 = vld [vmem:[#allocation7 + $0xf8] sm:$0xff]
    %v617 = vld [vmem:[%s4] sm:$0x1]
    %v619 = vlaneseq
    %v620 = vshrl.u32 %v619, 7
    %v621 = vsub.s32 0, %v620
    %v622 = vrot.slane %v617, %v621
    %624 = vmatprep.subr.mxu0 0.0
    %625 = vmatpush1.msra.mxu0 %v585
    %626 = vmatprep.subr.mxu0 0.0
    %627 = vmatpush1.msra.mxu0 %v586
    %628 = vmatprep.subr.mxu0 0.0
    %629 = vmatpush1.msra.mxu0 %v587
    %630 = vmatprep.subr.mxu0 0.0
    %631 = vmatpush1.msra.mxu0 %v588
    %632 = vmatprep.subr.mxu0 0.0
    %633 = vmatpush1.msra.mxu0 %v589
    %634 = vmatprep.subr.mxu0 0.0
    %635 = vmatpush1.msra.mxu0 %v590
    %636 = vmatprep.subr.mxu0 0.0
    %637 = vmatpush1.msra.mxu0 %v591
    %638 = vmatprep.subr.mxu0 0.0
    %639 = vmatpush1.msra.mxu0 %v592
    %640 = vmatprep.subr.mxu0 0.0
    %641 = vmatpush1.msra.mxu0 %v593
    %642 = vmatprep.subr.mxu0 0.0
    %643 = vmatpush1.msra.mxu0 %v594
    %644 = vmatprep.subr.mxu0 0.0
    %645 = vmatpush1.msra.mxu0 %v595
    %646 = vmatprep.subr.mxu0 0.0
    %647 = vmatpush1.msra.mxu0 %v596
    %648 = vmatprep.subr.mxu0 0.0
    %649 = vmatpush1.msra.mxu0 %v597
    %650 = vmatprep.subr.mxu0 0.0
    %651 = vmatpush1.msra.mxu0 %v598
    %652 = vmatprep.subr.mxu0 0.0
    %653 = vmatpush1.msra.mxu0 %v599
    %654 = vmatprep.subr.mxu0 0.0
    %655 = vmatpush1.msra.mxu0 %v600
    %656 = vmatprep.subr.mxu0 0.0
    %657 = vmatpush1.msra.mxu0 %v601
    %658 = vmatprep.subr.mxu0 0.0
    %659 = vmatpush1.msra.mxu0 %v602
    %660 = vmatprep.subr.mxu0 0.0
    %661 = vmatpush1.msra.mxu0 %v603
    %662 = vmatprep.subr.mxu0 0.0
    %663 = vmatpush1.msra.mxu0 %v604
    %664 = vmatprep.subr.mxu0 0.0
    %665 = vmatpush1.msra.mxu0 %v605
    %666 = vmatprep.subr.mxu0 0.0
    %667 = vmatpush1.msra.mxu0 %v606
    %668 = vmatprep.subr.mxu0 0.0
    %669 = vmatpush1.msra.mxu0 %v607
    %670 = vmatprep.subr.mxu0 0.0
    %671 = vmatpush1.msra.mxu0 %v608
    %672 = vmatprep.subr.mxu0 0.0
    %673 = vmatpush1.msra.mxu0 %v609
    %674 = vmatprep.subr.mxu0 0.0
    %675 = vmatpush1.msra.mxu0 %v610
    %676 = vmatprep.subr.mxu0 0.0
    %677 = vmatpush1.msra.mxu0 %v611
    %678 = vmatprep.subr.mxu0 0.0
    %679 = vmatpush1.msra.mxu0 %v612
    %680 = vmatprep.subr.mxu0 0.0
    %681 = vmatpush1.msra.mxu0 %v613
    %682 = vmatprep.subr.mxu0 0.0
    %683 = vmatpush1.msra.mxu0 %v614
    %684 = vmatprep.subr.mxu0 0.0
    %685 = vmatpush1.msra.mxu0 %v615
    %686 = vmatprep.subr.mxu0 0.0
    %687 = vmatpush1.msra.mxu0 %v616
    %688 = vmatprep.mubr.f32.mxu0 %v584
    %689 = vmatmul.mubr.f32.gmra.mrb[0].mxu0 %v583
    %v690 = vpop.f32.mrb[0].mxu0
    %v691 = vadd.f32 %v622, %v690
    %v692 = vpop.f32.mrb[0].mxu0
    %693 = vdwg.mxu0
    %v694 = vmax.f32 %v691, 0.0
    %v695 = vld [vmem:[#allocation8] sm:$0xff]
    %v696 = vld [vmem:[#allocation8 + $0x8] sm:$0xff]
    %v697 = vld [vmem:[#allocation8 + $0x10] sm:$0xff]
    %v698 = vld [vmem:[#allocation8 + $0x18] sm:$0xff]
    %v699 = vld [vmem:[#allocation8 + $0x20] sm:$0xff]
    %v700 = vld [vmem:[#allocation8 + $0x28] sm:$0xff]
    %v701 = vld [vmem:[#allocation8 + $0x30] sm:$0xff]
    %v702 = vld [vmem:[#allocation8 + $0x38] sm:$0xff]
    %v703 = vld [vmem:[#allocation8 + $0x40] sm:$0xff]
    %v704 = vld [vmem:[#allocation8 + $0x48] sm:$0xff]
    %v705 = vld [vmem:[#allocation8 + $0x50] sm:$0xff]
    %v706 = vld [vmem:[#allocation8 + $0x58] sm:$0xff]
    %v707 = vld [vmem:[#allocation8 + $0x60] sm:$0xff]
    %v708 = vld [vmem:[#allocation8 + $0x68] sm:$0xff]
    %v709 = vld [vmem:[#allocation8 + $0x70] sm:$0xff]
    %v710 = vld [vmem:[#allocation8 + $0x78] sm:$0xff]
    %v711 = vld [vmem:[%s6] sm:$0x1]
    %v713 = vlaneseq
    %v714 = vshrl.u32 %v713, 7
    %v715 = vsub.s32 0, %v714
    %v716 = vrot.slane %v711, %v715
    %718 = vmatprep.subr.mxu0 0.0
    %719 = vmatpush1.msra.mxu0 %v695
    %720 = vmatprep.subr.mxu0 0.0
    %721 = vmatpush1.msra.mxu0 %v696
    %722 = vmatprep.subr.mxu0 0.0
    %723 = vmatpush1.msra.mxu0 %v697
    %724 = vmatprep.subr.mxu0 0.0
    %725 = vmatpush1.msra.mxu0 %v698
    %726 = vmatprep.subr.mxu0 0.0
    %727 = vmatpush1.msra.mxu0 %v699
    %728 = vmatprep.subr.mxu0 0.0
    %729 = vmatpush1.msra.mxu0 %v700
    %730 = vmatprep.subr.mxu0 0.0
    %731 = vmatpush1.msra.mxu0 %v701
    %732 = vmatprep.subr.mxu0 0.0
    %733 = vmatpush1.msra.mxu0 %v702
    %734 = vmatprep.subr.mxu0 0.0
    %735 = vmatpush1.msra.mxu0 %v703
    %736 = vmatprep.subr.mxu0 0.0
    %737 = vmatpush1.msra.mxu0 %v704
    %738 = vmatprep.subr.mxu0 0.0
    %739 = vmatpush1.msra.mxu0 %v705
    %740 = vmatprep.subr.mxu0 0.0
    %741 = vmatpush1.msra.mxu0 %v706
    %742 = vmatprep.subr.mxu0 0.0
    %743 = vmatpush1.msra.mxu0 %v707
    %744 = vmatprep.subr.mxu0 0.0
    %745 = vmatpush1.msra.mxu0 %v708
    %746 = vmatprep.subr.mxu0 0.0
    %747 = vmatpush1.msra.mxu0 %v709
    %748 = vmatprep.subr.mxu0 0.0
    %749 = vmatpush1.msra.mxu0 %v710
    %750 = vmatprep.subr.mxu0 0.0
    %751 = vmatpush1.msra.mxu0 0.0
    %752 = vmatprep.subr.mxu0 0.0
    %753 = vmatpush1.msra.mxu0 0.0
    %754 = vmatprep.subr.mxu0 0.0
    %755 = vmatpush1.msra.mxu0 0.0
    %756 = vmatprep.subr.mxu0 0.0
    %757 = vmatpush1.msra.mxu0 0.0
    %758 = vmatprep.subr.mxu0 0.0
    %759 = vmatpush1.msra.mxu0 0.0
    %760 = vmatprep.subr.mxu0 0.0
    %761 = vmatpush1.msra.mxu0 0.0
    %762 = vmatprep.subr.mxu0 0.0
    %763 = vmatpush1.msra.mxu0 0.0
    %764 = vmatprep.subr.mxu0 0.0
    %765 = vmatpush1.msra.mxu0 0.0
    %766 = vmatprep.subr.mxu0 0.0
    %767 = vmatpush1.msra.mxu0 0.0
    %768 = vmatprep.subr.mxu0 0.0
    %769 = vmatpush1.msra.mxu0 0.0
    %770 = vmatprep.subr.mxu0 0.0
    %771 = vmatpush1.msra.mxu0 0.0
    %772 = vmatprep.subr.mxu0 0.0
    %773 = vmatpush1.msra.mxu0 0.0
    %774 = vmatprep.subr.mxu0 0.0
    %775 = vmatpush1.msra.mxu0 0.0
    %776 = vmatprep.subr.mxu0 0.0
    %777 = vmatpush1.msra.mxu0 0.0
    %778 = vmatprep.subr.mxu0 0.0
    %779 = vmatpush1.msra.mxu0 0.0
    %780 = vmatprep.subr.mxu0 0.0
    %781 = vmatpush1.msra.mxu0 0.0
    %782 = vmatprep.mubr.f32.mxu0 0.0
    %783 = vmatmul.mubr.f32.gmra.mrb[0].mxu0 %v694
    %v784 = vpop.f32.mrb[0].mxu0
    %v785 = vadd.f32 %v716, %v784
    %v786 = vpop.f32.mrb[0].mxu0
    %787 = vdwg.mxu0
    %788 = vst [vmem:[#allocation10] sm:$0xff] %v785
    // Predicated region
    $region46: #{tpu_custom_call.1} parent=1 // pred_check
      _
    $region47: #{tpu_custom_call.1} parent=1 // pred_check_branch
      %790 = sbr.rel (0) target = $region49
    $region48: #{tpu_custom_call.1} parent=1 // pred_region
      %s792 = ssub.s32 128, 128
      %793 = vsyncadd [#allocation4], %s792
      %s795 = sshll.u32 [#allocation10], 4
      %s796 = int_to_ptr.vmem [resolvable:$true] %s795
      %798 = dma.vmem_to_hbm [thread:$0]  %s796, 128, %s7, [#allocation4]
    $region49: #{tpu_custom_call.1} parent=1 // pred_fallthru
      _
    // Predicated region
    $region50: #{tpu_custom_call.1} parent=1 // pred_check
      _
    $region51: #{tpu_custom_call.1} parent=1 // pred_check_branch
      %800 = sbr.rel (0) target = $region53
    $region52: #{tpu_custom_call.1} parent=1 // pred_region
      %801 = dma.done [#allocation4], 128
    $region53: #{tpu_custom_call.1} parent=1 // pred_fallthru
      _
    %802 = vsyncpa [#allocation3], 1
    %803 = vsyncpa [#allocation6], 1
    %804 = vsyncpa [#allocation9], 1
    %805 = vsyncpa [#allocation4], 1

</llo_original>
